<compile_context>
chip_gen: v6e
topology: v6e:2x2x1
jax: 0.10.0
libtpu: 0.0.40
codegen_flags: <defaults>
</compile_context>

<pallas_src>
import functools

import jax
import jax.numpy as jnp
from jax.experimental import pallas as pl
from jax.experimental.pallas import tpu as pltpu

LANE = 128
SUBLANE = 8


def _ceil_to(x, m):
    return -(-x // m) * m


def tab_block_kernel(x_ref, w1_ref, t1_ref, w2_ref, t2_ref, o_ref):
    # x_ref : (C_in, TL)  one NCL tile (channels on sublanes, time on lanes)
    # w1_ref: (C_in, H)   conv1 weight with BN1 scale folded in
    # t1_ref: (1, H)      folded conv-bias/BN1 shift (f32)
    # w2_ref: (H, D)      conv2 weight with BN2 scale folded in
    # t2_ref: (1, D)      folded conv-bias/BN2 shift (f32)
    # o_ref : (TL, D)     channels-last output tile
    x = x_ref[...].astype(w1_ref.dtype)          # free VPU cast -> bf16 MXU path
    # h[t, j] = sum_c x[c, t] * w1[c, j]  -- TN contraction: the MXU takes the
    # transposed LHS, so no NCL->NLC transpose is needed anywhere.
    h = jax.lax.dot_general(
        x, w1_ref[...],
        dimension_numbers=(((0,), (0,)), ((), ())),
        preferred_element_type=jnp.float32)                      # (TL, H) f32
    h = jnp.maximum(h + t1_ref[...], 0.0)                        # shift + ReLU (f32)
    y = jnp.dot(h.astype(w2_ref.dtype), w2_ref[...],
                preferred_element_type=jnp.float32)              # (TL, D) f32
    y = jnp.maximum(y + t2_ref[...], 0.0)
    o_ref[...] = y.astype(o_ref.dtype)


def _fold_params(params, compute_dtype):
    """Fold conv bias + eval-mode BN into weight matrices (scale) and shifts."""
    (w1, b1, g1, beta1, rm1, rv1,
     w2, b2, g2, beta2, rm2, rv2) = params
    eps = 1e-5
    H = w1.shape[0]
    D = w2.shape[0]
    scale1 = g1 / jnp.sqrt(rv1 + eps)                                   # (H,)
    shift1 = ((b1 - rm1) * scale1 + beta1).astype(jnp.float32).reshape(1, H)
    scale2 = g2 / jnp.sqrt(rv2 + eps)                                   # (D,)
    shift2 = ((b2 - rm2) * scale2 + beta2).astype(jnp.float32).reshape(1, D)
    w1m = (jnp.transpose(w1[:, :, 0]) * scale1[None, :]).astype(compute_dtype)  # (C_in, H)
    w2m = (jnp.transpose(w2[:, :, 0]) * scale2[None, :]).astype(compute_dtype)  # (H, D)
    return w1m, shift1, w2m, shift2


@functools.partial(jax.jit, static_argnames=("compute_dtype", "out_dtype", "tl"))
def prepare_forward(x_ncl, params, *, compute_dtype=jnp.bfloat16,
                    out_dtype=None, tl=1024):
    """x_ncl: (N, C_in, L) -> (N, L, d_model), matching the PyTorch module
    (eval-mode BatchNorm).  Matmuls in `compute_dtype`, f32 accumulate/epilogue."""
    assert tl % LANE == 0 and tl >= LANE
    N, C_in, L = x_ncl.shape
    out_dtype = x_ncl.dtype if out_dtype is None else out_dtype
    w1m, shift1, w2m, shift2 = _fold_params(params, compute_dtype)
    H = w1m.shape[1]
    D = w2m.shape[1]

    in_itemsize = jnp.dtype(x_ncl.dtype).itemsize
    out_itemsize = jnp.dtype(out_dtype).itemsize
    w_itemsize = jnp.dtype(compute_dtype).itemsize

    # Advisory cost for XLA's scheduler around the custom call.
    cost = pl.CostEstimate(
        flops=2 * N * L * (C_in * H + H * D),
        transcendentals=0,
        bytes_accessed=(N * C_in * L * in_itemsize
                        + N * L * D * out_itemsize
                        + (C_in * H + H * D) * w_itemsize + (H + D) * 4))

    def _vmem_limit(tl_eff):
        # Double-buffered input/output tiles + h intermediate + resident weights.
        est = (2 * C_in * tl_eff * in_itemsize        # input bufs
               + tl_eff * H * 4                       # h intermediate (f32)
               + 2 * tl_eff * D * max(4, out_itemsize)  # output bufs
               + 2 * ((C_in * H + H * D) * w_itemsize + (H + D) * 4)
               + (1 << 20))                           # internal-scratch slack
        # Generous headroom, clamped so it always fits v7x's 32 MiB scoped VMEM.
        return int(min(max(4 * est, 16 * 1024 * 1024), 32 * 1024 * 1024))

    weight_args = (w1m, shift1, w2m, shift2)
    weight_specs = [
        pl.BlockSpec((C_in, H), lambda *_: (0, 0)),   # resident (constant index)
        pl.BlockSpec((1, H), lambda *_: (0, 0)),
        pl.BlockSpec((H, D), lambda *_: (0, 0)),
        pl.BlockSpec((1, D), lambda *_: (0, 0)),
    ]

    if L < LANE:
        # Small-L regime: per-batch (C_in, L) tiles would fill only L/128 lanes
        # and a sliver of the MXU M dimension, and N grid steps each pay the
        # ~0.35us step overhead.  Conv k=1 + BN are per-position, so fold batch
        # into the time axis; the repack is negligible at these sizes and the
        # output reshape back is free (row-major).
        M = N * L
        xc = jnp.transpose(x_ncl, (1, 0, 2)).reshape(C_in, M)
        TL = M if M <= tl else tl
        grid = (pl.cdiv(M, TL),)
        out2d = pl.pallas_call(
            tab_block_kernel,
            out_shape=jax.ShapeDtypeStruct((M, D), out_dtype),
            grid=grid,
            in_specs=[pl.BlockSpec((C_in, TL), lambda l: (0, l))] + weight_specs,
            out_specs=pl.BlockSpec((TL, D), lambda l: (l, 0)),
            compiler_params=pltpu.CompilerParams(
                dimension_semantics=("parallel",),
                vmem_limit_bytes=_vmem_limit(TL)),
            cost_estimate=cost,
        )(xc, *weight_args)
        return out2d.reshape(N, L, D)

    # Main path: read the NCL layout directly (no transpose, no pad), 2-D grid
    # over (batch, time-tiles).  The ragged last tile's out-of-bounds rows are
    # masked at writeback by Pallas, so no output slice is needed either.
    TL = L if L <= tl else tl
    grid = (N, pl.cdiv(L, TL))
    out = pl.pallas_call(
        tab_block_kernel,
        out_shape=jax.ShapeDtypeStruct((N, L, D), out_dtype),
        grid=grid,
        in_specs=[pl.BlockSpec((None, C_in, TL), lambda n, l: (n, 0, l))]
                 + weight_specs,
        out_specs=pl.BlockSpec((None, TL, D), lambda n, l: (n, l, 0)),
        compiler_params=pltpu.CompilerParams(
            dimension_semantics=("parallel", "parallel"),
            vmem_limit_bytes=_vmem_limit(TL)),
        cost_estimate=cost,
    )(x_ncl, *weight_args)
    return out


def reference_forward(x_ncl, params):
    """Pure-JAX reference of the PyTorch forward (eval-mode BN), f32."""
    (w1, b1, g1, beta1, rm1, rv1,
     w2, b2, g2, beta2, rm2, rv2) = params
    eps = 1e-5

    def conv1x1(x, w, b):  # x: (N, C_in, L), w: (C_out, C_in, 1)
        return jnp.einsum("ncl,oc->nol", x, w[:, :, 0]) + b[None, :, None]

    def bn(x, g, beta, rm, rv):
        return (x - rm[None, :, None]) / jnp.sqrt(rv[None, :, None] + eps) \
               * g[None, :, None] + beta[None, :, None]

    h = jax.nn.relu(bn(conv1x1(x_ncl, w1, b1), g1, beta1, rm1, rv1))
    y = jax.nn.relu(bn(conv1x1(h, w2, b2), g2, beta2, rm2, rv2))
    return jnp.transpose(y, (0, 2, 1))  # N C L -> N L C


if __name__ == "__main__":
    # Small shapes consistent with the module:
    #   feature_dim = 32, hidden = 128, d_model = 64
    N, C_IN, L = 2, 32, 16
    HIDDEN, D_MODEL = 128, 64

    key = jax.random.PRNGKey(0)
    k = jax.random.split(key, 8)

    x_f = jax.random.normal(k[0], (N, C_IN, L), dtype=jnp.float32)
    x_b = jax.random.normal(k[5], (N, C_IN, L), dtype=jnp.float32)

    w1 = jax.random.normal(k[1], (HIDDEN, C_IN, 1), dtype=jnp.float32) * 0.1
    b1 = jax.random.normal(k[2], (HIDDEN,), dtype=jnp.float32) * 0.01
    g1 = jnp.ones((HIDDEN,), jnp.float32)
    beta1 = jnp.zeros((HIDDEN,), jnp.float32)
    rm1 = jnp.zeros((HIDDEN,), jnp.float32)
    rv1 = jnp.ones((HIDDEN,), jnp.float32)

    w2 = jax.random.normal(k[3], (D_MODEL, HIDDEN, 1), dtype=jnp.float32) * 0.1
    b2 = jax.random.normal(k[4], (D_MODEL,), dtype=jnp.float32) * 0.01
    g2 = jnp.ones((D_MODEL,), jnp.float32)
    beta2 = jnp.zeros((D_MODEL,), jnp.float32)
    rm2 = jnp.zeros((D_MODEL,), jnp.float32)
    rv2 = jnp.ones((D_MODEL,), jnp.float32)

    params = (w1, b1, g1, beta1, rm1, rv1, w2, b2, g2, beta2, rm2, rv2)

    # f32 path, small-L regime (batch folded into the time axis, one grid step).
    out_f32 = jax.block_until_ready(
        prepare_forward(x_f, params, compute_dtype=jnp.float32))
    ref = reference_forward(x_f, params)
    assert out_f32.shape == (N, L, D_MODEL), out_f32.shape
    assert jnp.allclose(out_f32, ref, atol=1e-4, rtol=1e-4), \
        float(jnp.max(jnp.abs(out_f32 - ref)))

    # Default bf16-matmul path (f32 accumulate + epilogue).
    out_bf = jax.block_until_ready(prepare_forward(x_f, params))
    assert out_bf.shape == (N, L, D_MODEL), out_bf.shape
    assert jnp.allclose(out_bf.astype(jnp.float32), ref, atol=1e-1, rtol=1e-1), \
        float(jnp.max(jnp.abs(out_bf.astype(jnp.float32) - ref)))

    # Ragged L >= 128: 2-D grid, multi-tile pipelining, masked edge writeback
    # (no jnp.pad of x, no output slice).
    L2 = 200
    x2 = jax.random.normal(k[6], (N, C_IN, L2), dtype=jnp.float32)
    out2 = jax.block_until_ready(
        prepare_forward(x2, params, compute_dtype=jnp.float32, tl=128))
    ref2 = reference_forward(x2, params)
    assert out2.shape == (N, L2, D_MODEL), out2.shape
    assert jnp.allclose(out2, ref2, atol=1e-4, rtol=1e-4), \
        float(jnp.max(jnp.abs(out2 - ref2)))

    # Caller-provided bf16 activations: halves the dominant HBM read and the
    # writeback (bf16 out_dtype follows x), matmuls already bf16.
    out2_bf = jax.block_until_ready(
        prepare_forward(x2.astype(jnp.bfloat16), params, tl=128))
    assert out2_bf.dtype == jnp.bfloat16
    assert jnp.allclose(out2_bf.astype(jnp.float32), ref2, atol=1e-1, rtol=1e-1), \
        float(jnp.max(jnp.abs(out2_bf.astype(jnp.float32) - ref2)))

    # TAB_ADD-style combination of the two streams for a single (simplified,
    # k=1) layer: add the two per-stream block outputs and stack on dim=-1.
    tab = (prepare_forward(x_f, params) + prepare_forward(x_b, params))[..., None]
    jax.block_until_ready(tab)
    assert tab.shape == (N, L, D_MODEL, 1), tab.shape

    print("KERNEL_OK")
</pallas_src>

<mosaic_0001>
module attributes {stable_mosaic.version = 11 : i64} {
  func.func @tab_block_kernel(%arg0: i32, %arg1: memref<32x32xf32, #tpu.memory_space<vmem>>, %arg2: memref<32x128xf32, #tpu.memory_space<vmem>>, %arg3: memref<1x128xf32, #tpu.memory_space<vmem>>, %arg4: memref<128x64xf32, #tpu.memory_space<vmem>>, %arg5: memref<1x64xf32, #tpu.memory_space<vmem>>, %arg6: memref<32x64xf32, #tpu.memory_space<vmem>>) attributes {dimension_semantics = [#tpu.dimension_semantics<parallel>], iteration_bounds = array<i64: 1>, scalar_prefetch = 0 : i64, scratch_operands = 0 : i64, tpu.core_type = #tpu.core_type<tc>, window_params = [{transform_indices = @transform_0, window_bounds = array<i64: 32, 32>}, {pipeline_mode = #tpu.pipeline_mode<synchronous>, transform_indices = @transform_1, window_bounds = array<i64: 32, 128>}, {pipeline_mode = #tpu.pipeline_mode<synchronous>, transform_indices = @transform_2, window_bounds = array<i64: 1, 128>}, {pipeline_mode = #tpu.pipeline_mode<synchronous>, transform_indices = @transform_3, window_bounds = array<i64: 128, 64>}, {pipeline_mode = #tpu.pipeline_mode<synchronous>, transform_indices = @transform_4, window_bounds = array<i64: 1, 64>}, {transform_indices = @transform_5, window_bounds = array<i64: 32, 64>}]} {
    %c0 = arith.constant 0 : index
    %c0_0 = arith.constant 0 : index
    %0 = vector.load %arg1[%c0, %c0_0] : memref<32x32xf32, #tpu.memory_space<vmem>>, vector<32x32xf32>
    %c0_1 = arith.constant 0 : index
    %c0_2 = arith.constant 0 : index
    %1 = vector.load %arg2[%c0_1, %c0_2] : memref<32x128xf32, #tpu.memory_space<vmem>>, vector<32x128xf32>
    %cst = arith.constant dense<0.000000e+00> : vector<32x128xf32>
    %2 = tpu.matmul %0, %1, %cst {dimension_numbers = #tpu.dot_dimension_numbers<[0], [0], [1], [1], [0, 1, 1, 1], [], []>} : vector<32x32xf32>, vector<32x128xf32>, vector<32x128xf32> -> vector<32x128xf32>
    %c0_3 = arith.constant 0 : index
    %c0_4 = arith.constant 0 : index
    %3 = vector.load %arg3[%c0_3, %c0_4] : memref<1x128xf32, #tpu.memory_space<vmem>>, vector<1x128xf32>
    %4 = vector.broadcast %3 : vector<1x128xf32> to vector<32x128xf32>
    %5 = arith.addf %2, %4 : vector<32x128xf32>
    %cst_5 = arith.constant 0.000000e+00 : f32
    %6 = vector.broadcast %cst_5 : f32 to vector<32x128xf32>
    %7 = arith.maximumf %5, %6 : vector<32x128xf32>
    %c0_6 = arith.constant 0 : index
    %c0_7 = arith.constant 0 : index
    %8 = vector.load %arg4[%c0_6, %c0_7] : memref<128x64xf32, #tpu.memory_space<vmem>>, vector<128x64xf32>
    %cst_8 = arith.constant dense<0.000000e+00> : vector<32x64xf32>
    %9 = tpu.matmul %7, %8, %cst_8 {dimension_numbers = #tpu.dot_dimension_numbers<[1], [0], [0], [1], [0, 0, 1, 1], [], []>} : vector<32x128xf32>, vector<128x64xf32>, vector<32x64xf32> -> vector<32x64xf32>
    %c0_9 = arith.constant 0 : index
    %c0_10 = arith.constant 0 : index
    %10 = vector.load %arg5[%c0_9, %c0_10] : memref<1x64xf32, #tpu.memory_space<vmem>>, vector<1x64xf32>
    %11 = vector.broadcast %10 : vector<1x64xf32> to vector<32x64xf32>
    %12 = arith.addf %9, %11 : vector<32x64xf32>
    %cst_11 = arith.constant 0.000000e+00 : f32
    %13 = vector.broadcast %cst_11 : f32 to vector<32x64xf32>
    %14 = arith.maximumf %12, %13 : vector<32x64xf32>
    %c0_12 = arith.constant 0 : index
    %c0_13 = arith.constant 0 : index
    %15 = vector.load %arg6[%c0_12, %c0_13] : memref<32x64xf32, #tpu.memory_space<vmem>>, vector<32x64xf32>
    tpu.vector_store %arg6[%c0_12, %c0_13], %14 {strides = array<i32>} : memref<32x64xf32, #tpu.memory_space<vmem>>, vector<32x64xf32>,
    return
  }
  func.func @transform_0(%arg0: i32) -> (i32, i32) {
    %c0_i32 = arith.constant 0 : i32
    %c0_i32_0 = arith.constant 0 : i32
    return %c0_i32, %arg0 : i32, i32
  }
  func.func @transform_1(%arg0: i32) -> (i32, i32) {
    %c0_i32 = arith.constant 0 : i32
    %c0_i32_0 = arith.constant 0 : i32
    %c0_i32_1 = arith.constant 0 : i32
    return %c0_i32, %c0_i32_0 : i32, i32
  }
  func.func @transform_2(%arg0: i32) -> (i32, i32) {
    %c0_i32 = arith.constant 0 : i32
    %c0_i32_0 = arith.constant 0 : i32
    %c0_i32_1 = arith.constant 0 : i32
    return %c0_i32, %c0_i32_0 : i32, i32
  }
  func.func @transform_3(%arg0: i32) -> (i32, i32) {
    %c0_i32 = arith.constant 0 : i32
    %c0_i32_0 = arith.constant 0 : i32
    %c0_i32_1 = arith.constant 0 : i32
    return %c0_i32, %c0_i32_0 : i32, i32
  }
  func.func @transform_4(%arg0: i32) -> (i32, i32) {
    %c0_i32 = arith.constant 0 : i32
    %c0_i32_0 = arith.constant 0 : i32
    %c0_i32_1 = arith.constant 0 : i32
    return %c0_i32, %c0_i32_0 : i32, i32
  }
  func.func @transform_5(%arg0: i32) -> (i32, i32) {
    %c0_i32 = arith.constant 0 : i32
    %c0_i32_0 = arith.constant 0 : i32
    return %arg0, %c0_i32 : i32, i32
  }
}

</mosaic_0001>

<llo_original>
// kernel: prepare_forward.1
$region0: #{prepare_forward.1}
  #allocation0 [shape = 'u32[]', space=smem, size = 0x4, offset = 0x4, fixed_abs, tag = 'smem constant byte address 0x4 - core index']
  #allocation1 [shape = 'u32[144,128]{1,0:T(1,128)}', space=vmem, size = 0x12000, scoped, tag = 'internal scratch']
  %s0 = inlined_call_operand.vmem [shape: f32[32,32], index: 0, kind: input, shape index: {}]
  %s1 = inlined_call_operand.vmem [shape: f32[32,128], index: 1, kind: input, shape index: {}]
  %s2 = inlined_call_operand.vmem [shape: f32[1,128], index: 2, kind: input, shape index: {}]
  %s3 = inlined_call_operand.vmem [shape: f32[128,64], index: 3, kind: input, shape index: {}]
  %s4 = inlined_call_operand.vmem [shape: f32[1,64], index: 4, kind: input, shape index: {}]
  %s5 = inlined_call_operand.hbm [shape: f32[32,64], index: 5, kind: output, shape index: {}]
  %s6 = sld [smem:[#allocation0]]
  $region30: #{prepare_forward.1} parent=0
    _
  %s8 = ssub.s32 1, %s6
  %s9 = scalar_select 0, %s8, %s6
  $region1: #{prepare_forward.1} parent=0
    #allocation2 [shape = 'u8[16384]{0}', space=vmem, size = 0x4000, scoped, tag = 'output window, operand 0, single buffered']
    #allocation3 [shape = 's32[1]{0}', space=sflag, size = 0x4, scoped, tag = 'scoped memory for prepare_forward.1']
    %10 = vsyncpa [#allocation3], 0
    // Predicated region
    $region2: #{prepare_forward.1} parent=1 // pred_check
      _
    $region3: #{prepare_forward.1} parent=1 // pred_check_branch
      %12 = sbr.rel (0) target = $region5
    $region4: #{prepare_forward.1} parent=1 // pred_region
      _
    $region5: #{prepare_forward.1} parent=1 // pred_fallthru
      _
    // Predicated region
    $region6: #{prepare_forward.1} parent=1 // pred_check
      _
    $region7: #{prepare_forward.1} parent=1 // pred_check_branch
      %14 = sbr.rel (0) target = $region9
    $region8: #{prepare_forward.1} parent=1 // pred_region
      _
    $region9: #{prepare_forward.1} parent=1 // pred_fallthru
      _
    // Predicated region
    $region10: #{prepare_forward.1} parent=1 // pred_check
      _
    $region11: #{prepare_forward.1} parent=1 // pred_check_branch
      %16 = sbr.rel (0) target = $region13
    $region12: #{prepare_forward.1} parent=1 // pred_region
      _
    $region13: #{prepare_forward.1} parent=1 // pred_fallthru
      _
    // Predicated region
    $region14: #{prepare_forward.1} parent=1 // pred_check
      _
    $region15: #{prepare_forward.1} parent=1 // pred_check_branch
      %18 = sbr.rel (0) target = $region17
    $region16: #{prepare_forward.1} parent=1 // pred_region
      _
    $region17: #{prepare_forward.1} parent=1 // pred_fallthru
      _
    // Predicated region
    $region18: #{prepare_forward.1} parent=1 // pred_check
      _
    $region19: #{prepare_forward.1} parent=1 // pred_check_branch
      %20 = sbr.rel (0) target = $region21
    $region20: #{prepare_forward.1} parent=1 // pred_region
      _
    $region21: #{prepare_forward.1} parent=1 // pred_fallthru
      _
    %v21 = vld [vmem:[%s0] sm:$0xff]
    %v22 = vld [vmem:[%s0 + $0x8] sm:$0xff]
    %v23 = vld [vmem:[%s0 + $0x10] sm:$0xff]
    %v24 = vld [vmem:[%s0 + $0x18] sm:$0xff]
    %v25 = vld [vmem:[%s1] sm:$0xff]
    %v26 = vld [vmem:[%s1 + $0x8] sm:$0xff]
    %v27 = vld [vmem:[%s1 + $0x10] sm:$0xff]
    %v28 = vld [vmem:[%s1 + $0x18] sm:$0xff]
    %v29 = vld [vmem:[%s2] sm:$0x1]
    %v31 = vlaneseq
    %v32 = vshrl.u32 %v31, 7
    %v33 = vsub.s32 0, %v32
    %v34 = vrot.slane %v29, %v33
    %36 = vxpose.xlu0.b32.start [1/16] %v21, 128
    %37 = vxpose.xlu0.b32.cont [2/16] %v22, 128
    %38 = vxpose.xlu0.b32.cont [3/16] %v23, 128
    %39 = vxpose.xlu0.b32.cont [4/16] %v24, 128
    %40 = vxpose.xlu0.b32.cont [5/16] 0.0, 128
    %41 = vxpose.xlu0.b32.cont [6/16] 0.0, 128
    %42 = vxpose.xlu0.b32.cont [7/16] 0.0, 128
    %43 = vxpose.xlu0.b32.cont [8/16] 0.0, 128
    %44 = vxpose.xlu0.b32.cont [9/16] 0.0, 128
    %45 = vxpose.xlu0.b32.cont [10/16] 0.0, 128
    %46 = vxpose.xlu0.b32.cont [11/16] 0.0, 128
    %47 = vxpose.xlu0.b32.cont [12/16] 0.0, 128
    %48 = vxpose.xlu0.b32.cont [13/16] 0.0, 128
    %49 = vxpose.xlu0.b32.cont [14/16] 0.0, 128
    %50 = vxpose.xlu0.b32.cont [15/16] 0.0, 128
    %51 = vxpose.xlu0.b32.end [16/16] 0.0, 128
    %v52 = vpop.trf.xlu0
    %v53 = vpop.trf.xlu0
    %v54 = vpop.trf.xlu0
    %v55 = vpop.trf.xlu0
    %v56 = vpop.trf.xlu0
    %v57 = vpop.trf.xlu0
    %v58 = vpop.trf.xlu0
    %v59 = vpop.trf.xlu0
    %v60 = vpop.trf.xlu0
    %v61 = vpop.trf.xlu0
    %v62 = vpop.trf.xlu0
    %v63 = vpop.trf.xlu0
    %v64 = vpop.trf.xlu0
    %v65 = vpop.trf.xlu0
    %v66 = vpop.trf.xlu0
    %v67 = vpop.trf.xlu0
    %vm68 = vcmask 261120
    %v70 = vsel %vm68, %v52, 0
    %v73 = vsel %vm68, %v53, 0
    %v76 = vsel %vm68, %v54, 0
    %v79 = vsel %vm68, %v55, 0
    %81 = vmatprep.subr.mxu0 0.0
    %82 = vmatpush1.msra.mxu0 0.0
    %83 = vmatprep.subr.mxu0 0.0
    %84 = vmatpush1.msra.mxu0 0.0
    %85 = vmatprep.subr.mxu0 0.0
    %86 = vmatpush1.msra.mxu0 0.0
    %87 = vmatprep.subr.mxu0 0.0
    %88 = vmatpush1.msra.mxu0 0.0
    %89 = vmatprep.subr.mxu0 0.0
    %90 = vmatpush1.msra.mxu0 0.0
    %91 = vmatprep.subr.mxu0 0.0
    %92 = vmatpush1.msra.mxu0 0.0
    %93 = vmatprep.subr.mxu0 0.0
    %94 = vmatpush1.msra.mxu0 0.0
    %95 = vmatprep.subr.mxu0 0.0
    %96 = vmatpush1.msra.mxu0 0.0
    %97 = vmatprep.subr.mxu0 0.0
    %98 = vmatpush1.msra.mxu0 0.0
    %99 = vmatprep.subr.mxu0 0.0
    %100 = vmatpush1.msra.mxu0 0.0
    %101 = vmatprep.subr.mxu0 0.0
    %102 = vmatpush1.msra.mxu0 0.0
    %103 = vmatprep.subr.mxu0 0.0
    %104 = vmatpush1.msra.mxu0 0.0
    %105 = vmatprep.subr.mxu0 0.0
    %106 = vmatpush1.msra.mxu0 %v28
    %107 = vmatprep.subr.mxu0 0.0
    %108 = vmatpush1.msra.mxu0 %v27
    %109 = vmatprep.subr.mxu0 0.0
    %110 = vmatpush1.msra.mxu0 %v26
    %111 = vmatprep.subr.mxu0 0.0
    %112 = vmatpush1.msra.mxu0 %v25
    %113 = vmatprep.subr.mxu0 0.0
    %114 = vmatpush2.msra.mxu0 0.0
    %115 = vmatprep.subr.mxu0 0.0
    %116 = vmatpush2.msra.mxu0 0.0
    %117 = vmatprep.subr.mxu0 0.0
    %118 = vmatpush2.msra.mxu0 0.0
    %119 = vmatprep.subr.mxu0 0.0
    %120 = vmatpush2.msra.mxu0 0.0
    %121 = vmatprep.subr.mxu0 0.0
    %122 = vmatpush2.msra.mxu0 0.0
    %123 = vmatprep.subr.mxu0 0.0
    %124 = vmatpush2.msra.mxu0 0.0
    %125 = vmatprep.subr.mxu0 0.0
    %126 = vmatpush2.msra.mxu0 0.0
    %127 = vmatprep.subr.mxu0 0.0
    %128 = vmatpush2.msra.mxu0 0.0
    %129 = vmatprep.subr.mxu0 0.0
    %130 = vmatpush2.msra.mxu0 0.0
    %131 = vmatprep.subr.mxu0 0.0
    %132 = vmatpush2.msra.mxu0 0.0
    %133 = vmatprep.subr.mxu0 0.0
    %134 = vmatpush2.msra.mxu0 0.0
    %135 = vmatprep.subr.mxu0 0.0
    %136 = vmatpush2.msra.mxu0 0.0
    %137 = vmatprep.subr.mxu0 0.0
    %138 = vmatpush2.msra.mxu0 0.0
    %139 = vmatprep.subr.mxu0 0.0
    %140 = vmatpush2.msra.mxu0 0.0
    %141 = vmatprep.subr.mxu0 0.0
    %142 = vmatpush2.msra.mxu0 0.0
    %143 = vmatprep.subr.mxu0 0.0
    %144 = vmatpush2.msra.mxu0 0.0
    %145 = vmatprep.mubr.f32.mxu0 0.0
    %146 = vmatmul.mubr.f32.gmra.mxu0 %v70
    %v147 = vpop.f32.mrf.mxu0
    %v148 = vadd.f32 %v34, %v147
    %v149 = vpop.f32.mrf.mxu0
    %150 = vmatprep.mubr.f32.mxu0 0.0
    %151 = vmatmul.mubr.f32.gmra.mxu0 %v73
    %v152 = vpop.f32.mrf.mxu0
    %v153 = vadd.f32 %v34, %v152
    %v154 = vpop.f32.mrf.mxu0
    %155 = vmatprep.mubr.f32.mxu0 0.0
    %156 = vmatmul.mubr.f32.gmra.mxu0 %v76
    %v157 = vpop.f32.mrf.mxu0
    %v158 = vadd.f32 %v34, %v157
    %v159 = vpop.f32.mrf.mxu0
    %160 = vmatprep.mubr.f32.mxu0 0.0
    %161 = vmatmul.mubr.f32.gmra.mxu0 %v79
    %v162 = vpop.f32.mrf.mxu0
    %v163 = vadd.f32 %v34, %v162
    %v164 = vpop.f32.mrf.mxu0
    %165 = vdwg.mxu0
    %v166 = vmax.f32 %v148, 0.0
    %v167 = vmax.f32 %v153, 0.0
    %v168 = vmax.f32 %v158, 0.0
    %v169 = vmax.f32 %v163, 0.0
    %v170 = vld [vmem:[%s3] sm:$0xff]
    %v171 = vld [vmem:[%s3 + $0x8] sm:$0xff]
    %v172 = vld [vmem:[%s3 + $0x10] sm:$0xff]
    %v173 = vld [vmem:[%s3 + $0x18] sm:$0xff]
    %v174 = vld [vmem:[%s3 + $0x20] sm:$0xff]
    %v175 = vld [vmem:[%s3 + $0x28] sm:$0xff]
    %v176 = vld [vmem:[%s3 + $0x30] sm:$0xff]
    %v177 = vld [vmem:[%s3 + $0x38] sm:$0xff]
    %v178 = vld [vmem:[%s3 + $0x40] sm:$0xff]
    %v179 = vld [vmem:[%s3 + $0x48] sm:$0xff]
    %v180 = vld [vmem:[%s3 + $0x50] sm:$0xff]
    %v181 = vld [vmem:[%s3 + $0x58] sm:$0xff]
    %v182 = vld [vmem:[%s3 + $0x60] sm:$0xff]
    %v183 = vld [vmem:[%s3 + $0x68] sm:$0xff]
    %v184 = vld [vmem:[%s3 + $0x70] sm:$0xff]
    %v185 = vld [vmem:[%s3 + $0x78] sm:$0xff]
    %v186 = vld [vmem:[%s4] sm:$0x1]
    %v188 = vlaneseq
    %v189 = vshrl.u32 %v188, 7
    %v190 = vsub.s32 0, %v189
    %v191 = vrot.slane %v186, %v190
    %193 = vmatprep.subr.mxu0 0.0
    %194 = vmatpush1.msra.mxu0 %v185
    %195 = vmatprep.subr.mxu0 0.0
    %196 = vmatpush1.msra.mxu0 %v184
    %197 = vmatprep.subr.mxu0 0.0
    %198 = vmatpush1.msra.mxu0 %v183
    %199 = vmatprep.subr.mxu0 0.0
    %200 = vmatpush1.msra.mxu0 %v182
    %201 = vmatprep.subr.mxu0 0.0
    %202 = vmatpush1.msra.mxu0 %v181
    %203 = vmatprep.subr.mxu0 0.0
    %204 = vmatpush1.msra.mxu0 %v180
    %205 = vmatprep.subr.mxu0 0.0
    %206 = vmatpush1.msra.mxu0 %v179
    %207 = vmatprep.subr.mxu0 0.0
    %208 = vmatpush1.msra.mxu0 %v178
    %209 = vmatprep.subr.mxu0 0.0
    %210 = vmatpush1.msra.mxu0 %v177
    %211 = vmatprep.subr.mxu0 0.0
    %212 = vmatpush1.msra.mxu0 %v176
    %213 = vmatprep.subr.mxu0 0.0
    %214 = vmatpush1.msra.mxu0 %v175
    %215 = vmatprep.subr.mxu0 0.0
    %216 = vmatpush1.msra.mxu0 %v174
    %217 = vmatprep.subr.mxu0 0.0
    %218 = vmatpush1.msra.mxu0 %v173
    %219 = vmatprep.subr.mxu0 0.0
    %220 = vmatpush1.msra.mxu0 %v172
    %221 = vmatprep.subr.mxu0 0.0
    %222 = vmatpush1.msra.mxu0 %v171
    %223 = vmatprep.subr.mxu0 0.0
    %224 = vmatpush1.msra.mxu0 %v170
    %225 = vmatprep.subr.mxu0 0.0
    %226 = vmatpush2.msra.mxu0 0.0
    %227 = vmatprep.subr.mxu0 0.0
    %228 = vmatpush2.msra.mxu0 0.0
    %229 = vmatprep.subr.mxu0 0.0
    %230 = vmatpush2.msra.mxu0 0.0
    %231 = vmatprep.subr.mxu0 0.0
    %232 = vmatpush2.msra.mxu0 0.0
    %233 = vmatprep.subr.mxu0 0.0
    %234 = vmatpush2.msra.mxu0 0.0
    %235 = vmatprep.subr.mxu0 0.0
    %236 = vmatpush2.msra.mxu0 0.0
    %237 = vmatprep.subr.mxu0 0.0
    %238 = vmatpush2.msra.mxu0 0.0
    %239 = vmatprep.subr.mxu0 0.0
    %240 = vmatpush2.msra.mxu0 0.0
    %241 = vmatprep.subr.mxu0 0.0
    %242 = vmatpush2.msra.mxu0 0.0
    %243 = vmatprep.subr.mxu0 0.0
    %244 = vmatpush2.msra.mxu0 0.0
    %245 = vmatprep.subr.mxu0 0.0
    %246 = vmatpush2.msra.mxu0 0.0
    %247 = vmatprep.subr.mxu0 0.0
    %248 = vmatpush2.msra.mxu0 0.0
    %249 = vmatprep.subr.mxu0 0.0
    %250 = vmatpush2.msra.mxu0 0.0
    %251 = vmatprep.subr.mxu0 0.0
    %252 = vmatpush2.msra.mxu0 0.0
    %253 = vmatprep.subr.mxu0 0.0
    %254 = vmatpush2.msra.mxu0 0.0
    %255 = vmatprep.subr.mxu0 0.0
    %256 = vmatpush2.msra.mxu0 0.0
    %257 = vmatprep.mubr.f32.mxu0 0.0
    %258 = vmatmul.mubr.f32.gmra.mxu0 %v166
    %v259 = vpop.f32.mrf.mxu0
    %v260 = vadd.f32 %v191, %v259
    %v261 = vpop.f32.mrf.mxu0
    %262 = vmatprep.mubr.f32.mxu0 0.0
    %263 = vmatmul.mubr.f32.gmra.mxu0 %v167
    %v264 = vpop.f32.mrf.mxu0
    %v265 = vadd.f32 %v191, %v264
    %v266 = vpop.f32.mrf.mxu0
    %267 = vmatprep.mubr.f32.mxu0 0.0
    %268 = vmatmul.mubr.f32.gmra.mxu0 %v168
    %v269 = vpop.f32.mrf.mxu0
    %v270 = vadd.f32 %v191, %v269
    %v271 = vpop.f32.mrf.mxu0
    %272 = vmatprep.mubr.f32.mxu0 0.0
    %273 = vmatmul.mubr.f32.gmra.mxu0 %v169
    %v274 = vpop.f32.mrf.mxu0
    %v275 = vadd.f32 %v191, %v274
    %v276 = vpop.f32.mrf.mxu0
    %277 = vdwg.mxu0
    %v278 = vmax.f32 %v260, 0.0
    %v279 = vmax.f32 %v265, 0.0
    %v280 = vmax.f32 %v270, 0.0
    %v281 = vmax.f32 %v275, 0.0
    %vm282 = vcmask 523264
    %283 = vst.msk [vmem:[#allocation2] sm:$0xff] %vm282, %v278
    %284 = vst.msk [vmem:[#allocation2 + $0x8] sm:$0xff] %vm282, %v279
    %285 = vst.msk [vmem:[#allocation2 + $0x10] sm:$0xff] %vm282, %v280
    %286 = vst.msk [vmem:[#allocation2 + $0x18] sm:$0xff] %vm282, %v281
    // Predicated region
    $region22: #{prepare_forward.1} parent=1 // pred_check
      _
    $region23: #{prepare_forward.1} parent=1 // pred_check_branch
      %288 = sbr.rel (0) target = $region25
    $region24: #{prepare_forward.1} parent=1 // pred_region
      %s290 = ssub.s32 512, 512
      %291 = vsyncadd [#allocation3], %s290
      %s292 = sshll.u32 [#allocation2], 4
      %s293 = int_to_ptr.vmem [resolvable:$true] %s292
      %298 = dma.vmem_to_hbm [thread:$0]  %s293, 512, %s5, [#allocation3], 128, 128, 8
    $region25: #{prepare_forward.1} parent=1 // pred_fallthru
      _
    // Predicated region
    $region26: #{prepare_forward.1} parent=1 // pred_check
      _
    $region27: #{prepare_forward.1} parent=1 // pred_check_branch
      %300 = sbr.rel (0) target = $region29
    $region28: #{prepare_forward.1} parent=1 // pred_region
      %301 = dma.done [#allocation3], 512
    $region29: #{prepare_forward.1} parent=1 // pred_fallthru
      _
    %302 = vsyncpa [#allocation3], 1

</llo_original>
